<compile_context>
chip_gen: v5e
topology: v5e:2x2
jax: 0.10.0
libtpu: 0.0.40
codegen_flags: <defaults>
</compile_context>

<pallas_src>
import functools
import numpy as np
import jax
import jax.numpy as jnp
from jax.experimental import pallas as pl
from jax.experimental.pallas import tpu as pltpu

FLOAT_MIN = -3.4e+38
FLOAT_MAX = 3.4e+38


def _round_up(n, m):
    return ((n + m - 1) // m) * m


def _cdiv(a, b):
    return -(-a // b)


# ----------------------------------------------------------------------------
# Pallas kernel: full GrowingActionDQN forward (n_levels == 2), packed output
# ----------------------------------------------------------------------------
def _dqn_kernel(np_width,
                x_ref, am_ref, sm_ref, lens_ref,
                ew1_ref, eb1_ref, ew2_ref, eb2_ref,
                dw0_ref, db0_ref, w0_ref, b0_ref, vw1_ref, vb1_ref,
                out_ref):
    f32 = jnp.float32

    def lin(h, w_ref, b_ref):
        # matmul operands may be bf16; accumulate + bias in f32.
        return jnp.dot(h.astype(w_ref.dtype), w_ref[...],
                       preferred_element_type=f32) + b_ref[...]

    # encoder: Linear(obs,128) -> ReLU -> Linear(128,64) -> ReLU
    h = jnp.maximum(lin(x_ref[...], ew1_ref, eb1_ref), 0.0)
    embed = jnp.maximum(lin(h, ew2_ref, eb2_ref), 0.0)

    # decoders[0]
    e0 = jnp.maximum(lin(embed, dw0_ref, db0_ref), 0.0)

    # Fused matmul from e0:
    #   [ packed Q-base (NP lanes):  vw0 @ [0,nc), vw0 expanded @ [nc,nc+nf),
    #     zeros elsewhere | decoders[1] padded to 128 lanes ]
    out0 = lin(e0, w0_ref, b0_ref)                       # (TM, NP + 128)
    q_base = out0[:, :np_width]                          # aligned 128-lane slice
    e1 = jnp.maximum(out0[:, np_width:], 0.0)            # aligned, K=128

    # evaluators[1] already laid out in packed coordinates:
    #   q1 at [nc, nc+nf) (for totalQ1) and duplicated at [nc+nf, nc+2nf) (delta).
    q1p = lin(e1, vw1_ref, vb1_ref)                      # (TM, NP)

    # Masks via one small matmul against a static 0/1 matrix.
    # action_mask entries are exactly {0,1}: prod over a segment == 1 <=> sum
    # over the segment == segment_len.  Sums are small integers -> exact.
    am = am_ref[...]                                     # f32, natural width nf
    seg_sum = jnp.dot(am, sm_ref[...], preferred_element_type=f32)  # (TM, 2*NP)
    m = jnp.where(seg_sum == lens_ref[...], FLOAT_MIN, 0.0)
    mask = m[:, :np_width] + m[:, np_width:]
    # mask layout: mask0_c @ [0,nc) | mask0_f + mask1 @ [nc,nc+nf) |
    #              mask1 @ [nc+nf, nc+2nf) | 0 elsewhere.

    # NOTE: torch.clamp(totalQ, FLOAT_MIN, FLOAT_MAX) in the reference is not
    # assigned back -> no-op, intentionally omitted.
    out_ref[...] = q_base + q1p + mask


# ----------------------------------------------------------------------------
# One-time parameter preparation (hoisted out of the per-step forward)
# ----------------------------------------------------------------------------
def prepare_params(params, sales_blend_lens, use_bf16=True):
    """Fuse / pad / cast weights once.  Returns (prepared_dict, meta_dict)."""
    f32 = jnp.float32
    cdt = jnp.bfloat16 if use_bf16 else f32

    lens = tuple(int(l) for l in sales_blend_lens)
    nc = len(lens)
    nf = int(sum(lens))
    NP = _round_up(nc + 2 * nf, 128)           # packed output lane width
    fine_to_coarse = np.repeat(np.arange(nc), lens)      # (nf,)

    vw0 = np.asarray(params["vw0"], np.float32)          # (64, nc)
    vb0 = np.asarray(params["vb0"], np.float32)          # (1, nc)
    dw1 = np.asarray(params["dw1"], np.float32)          # (64, 64)
    db1 = np.asarray(params["db1"], np.float32)          # (1, 64)
    vw1 = np.asarray(params["vw1"], np.float32)          # (64, nf)
    vb1 = np.asarray(params["vb1"], np.float32)          # (1, nf)

    # Fused weight from e0: packed evaluator-0 columns (repeat_interleave
    # folded in as exact column copies) + decoders[1] padded to 128 lanes.
    W0 = np.zeros((64, NP + 128), np.float32)
    B0 = np.zeros((1, NP + 128), np.float32)
    W0[:, :nc] = vw0
    W0[:, nc:nc + nf] = vw0[:, fine_to_coarse]
    W0[:, NP:NP + 64] = dw1
    B0[:, :nc] = vb0
    B0[:, nc:nc + nf] = vb0[:, fine_to_coarse]
    B0[:, NP:NP + 64] = db1

    # evaluators[1] in packed coordinates, 128 (zero-padded) input rows.
    VW1 = np.zeros((128, NP), np.float32)
    VB1 = np.zeros((1, NP), np.float32)
    VW1[:64, nc:nc + nf] = vw1
    VW1[:64, nc + nf:nc + 2 * nf] = vw1
    VB1[:, nc:nc + nf] = vb1
    VB1[:, nc + nf:nc + 2 * nf] = vb1

    # Static segment matrix (nf, 2*NP) + comparison lengths (1, 2*NP).
    seg = np.zeros((nf, nc), np.float32)
    seg[np.arange(nf), fine_to_coarse] = 1.0             # fine -> coarse one-hot
    P = seg @ seg.T                                      # (nf, nf) same-segment 0/1
    SM = np.zeros((nf, 2 * NP), np.float32)
    SM[:, :nc] = seg
    SM[:, nc:nc + nf] = P
    SM[:, nc + nf:nc + 2 * nf] = np.eye(nf, dtype=np.float32)
    SM[:, NP + nc:NP + nc + nf] = np.eye(nf, dtype=np.float32)
    lens_np = np.asarray(lens, np.float32)
    LENS = np.full((1, 2 * NP), -1.0, np.float32)        # -1: never matches 0
    LENS[0, :nc] = lens_np
    LENS[0, nc:nc + nf] = lens_np[fine_to_coarse]
    LENS[0, nc + nf:nc + 2 * nf] = 1.0
    LENS[0, NP + nc:NP + nc + nf] = 1.0

    prepared = dict(
        ew1=jnp.asarray(params["ew1"], cdt), eb1=jnp.asarray(params["eb1"], f32),
        ew2=jnp.asarray(params["ew2"], cdt), eb2=jnp.asarray(params["eb2"], f32),
        dw0=jnp.asarray(params["dw0"], cdt), db0=jnp.asarray(params["db0"], f32),
        w0=jnp.asarray(W0, cdt), b0=jnp.asarray(B0, f32),
        vw1=jnp.asarray(VW1, cdt), vb1=jnp.asarray(VB1, f32),
        sm=jnp.asarray(SM, f32), lens=jnp.asarray(LENS, f32),
    )
    meta = dict(nc=nc, nf=nf, NP=NP)
    return prepared, meta


# ----------------------------------------------------------------------------
# Forward wrapper
# ----------------------------------------------------------------------------
def growing_action_dqn_forward(x, action_mask, prepared, meta, tm=None):
    f32 = jnp.float32
    nc, nf, NP = meta["nc"], meta["nf"], meta["NP"]
    cdt = prepared["ew1"].dtype

    B, obs_dim = x.shape

    # Batch tile policy:
    #  * cap ~512 rows (mem-bound kernels hit ~85% of HBM roofline at 512+),
    #  * >= 2 grid steps when B > 8 so v7x shards the batch across both TCs,
    #  * choose tm so B_pad - B < one tile (bounds padded-traffic waste).
    if tm is None:
        n_tiles = max(2 if B > 8 else 1, _cdiv(B, 512))
        tm = _round_up(_cdiv(B, n_tiles), 8)
    else:
        tm = _round_up(tm, 8)
    B_pad = _round_up(B, tm)

    x_p = jnp.pad(x, ((0, B_pad - B), (0, 0))).astype(cdt)
    am_p = jnp.pad(action_mask.astype(f32), ((0, B_pad - B), (0, 0)))

    args = (x_p, am_p, prepared["sm"], prepared["lens"],
            prepared["ew1"], prepared["eb1"], prepared["ew2"], prepared["eb2"],
            prepared["dw0"], prepared["db0"], prepared["w0"], prepared["b0"],
            prepared["vw1"], prepared["vb1"])

    def rows(i):
        return (i, 0)

    def fixed(i):
        return (0, 0)          # same block every step -> stays VMEM-resident

    in_specs = ([pl.BlockSpec((tm, obs_dim), rows),
                 pl.BlockSpec((tm, nf), rows)]          # natural-width mask
                + [pl.BlockSpec(a.shape, fixed) for a in args[2:]])
    out_specs = pl.BlockSpec((tm, NP), rows)

    flops = 2 * B_pad * (obs_dim * 128 + 128 * 64 + 64 * 64
                         + 64 * (NP + 128) + 128 * NP + nf * 2 * NP)
    bytes_accessed = int(sum(int(np.prod(a.shape)) * a.dtype.itemsize
                             for a in args)
                         + 4 * B_pad * NP)

    out = pl.pallas_call(
        functools.partial(_dqn_kernel, NP),
        out_shape=jax.ShapeDtypeStruct((B_pad, NP), f32),
        grid=(B_pad // tm,),
        in_specs=in_specs,
        out_specs=out_specs,
        compiler_params=pltpu.CompilerParams(
            dimension_semantics=("parallel",)),
        cost_estimate=pl.CostEstimate(flops=flops, transcendentals=0,
                                      bytes_accessed=bytes_accessed),
    )(*args)

    totalQ0 = out[:B, :nc]
    totalQ1 = out[:B, nc:nc + nf]
    delta1 = out[:B, nc + nf:nc + 2 * nf]
    return [totalQ0, totalQ1], [delta1]


# ----------------------------------------------------------------------------
# Pure-JAX reference (same math as the PyTorch forward, matching operand dtype)
# ----------------------------------------------------------------------------
def reference_forward(x, am, p, lens, use_bf16=True):
    cdt = jnp.bfloat16 if use_bf16 else jnp.float32
    f32 = jnp.float32

    def lin(h, w, b):
        return jnp.dot(h.astype(cdt), w.astype(cdt),
                       preferred_element_type=f32) + b

    h = jax.nn.relu(lin(x, p["ew1"], p["eb1"]))
    embed = jax.nn.relu(lin(h, p["ew2"], p["eb2"]))
    e0 = jax.nn.relu(lin(embed, p["dw0"], p["db0"]))
    q0 = lin(e0, p["vw0"], p["vb0"])
    splits = np.cumsum(lens)[:-1]
    coarse = jnp.stack([jnp.prod(s, axis=1)
                        for s in jnp.split(am, splits, axis=1)], axis=1)
    mask0 = jnp.where(coarse == 1.0, FLOAT_MIN, 0.0)
    t0 = q0 + mask0
    e1 = jax.nn.relu(lin(e0, p["dw1"], p["db1"]))
    q1 = lin(e1, p["vw1"], p["vb1"])
    mask1 = jnp.where(am == 1.0, FLOAT_MIN, 0.0)
    lq1 = q1 + mask1
    t1 = lq1 + jnp.repeat(t0, jnp.array(lens), axis=1,
                          total_repeat_length=int(sum(lens)))
    return [t0, t1], [lq1]


# ----------------------------------------------------------------------------
# Deterministic parameter construction (shapes from __init__)
# ----------------------------------------------------------------------------
def make_params(key, obs_dim, sales_blend_lens):
    n_coarse = len(sales_blend_lens)          # env.n_actions[0]
    n_fine = int(sum(sales_blend_lens))       # env.n_actions[1]
    ks = jax.random.split(key, 8)

    def w(k, fan_in, fan_out):
        return (jax.random.normal(k, (fan_in, fan_out), jnp.float32)
                / np.sqrt(fan_in)).astype(jnp.float32)

    p = {
        "ew1": w(ks[0], obs_dim, 128), "eb1": jnp.zeros((1, 128), jnp.float32) + 0.01,
        "ew2": w(ks[1], 128, 64),      "eb2": jnp.zeros((1, 64), jnp.float32) + 0.01,
        "dw0": w(ks[2], 64, 64),       "db0": jnp.zeros((1, 64), jnp.float32) + 0.01,
        "vw0": w(ks[3], 64, n_coarse), "vb0": jnp.zeros((1, n_coarse), jnp.float32) + 0.01,
        "dw1": w(ks[4], 64, 64),       "db1": jnp.zeros((1, 64), jnp.float32) + 0.01,
        # evaluators[1]: bias zeroed, weight scaled by 0.01 (as in __init__)
        "vw1": w(ks[5], 64, n_fine) * 0.01,
        "vb1": jnp.zeros((1, n_fine), jnp.float32),
    }
    return p


if __name__ == "__main__":
    key = jax.random.PRNGKey(0)
    B = 8
    OBS_DIM = 32
    SALES_BLEND_LENS = (3, 2, 3)   # n_actions = [3, 8]
    N_FINE = int(sum(SALES_BLEND_LENS))

    kx, km, kp = jax.random.split(key, 3)
    x = jax.random.normal(kx, (B, OBS_DIM), jnp.float32)
    action_mask = jax.random.bernoulli(km, 0.4, (B, N_FINE)).astype(jnp.float32)
    params = make_params(kp, OBS_DIM, SALES_BLEND_LENS)

    # One-time weight fusion / padding / casts (hoisted out of the step fn).
    prepared, meta = prepare_params(params, SALES_BLEND_LENS, use_bf16=True)

    fwd = jax.jit(lambda xx, mm, pp: growing_action_dqn_forward(xx, mm, pp, meta))
    allQs, allDeltas = fwd(x, action_mask, prepared)
    jax.block_until_ready(allQs)
    jax.block_until_ready(allDeltas)

    # sanity check against pure-JAX reference (same bf16-operand / f32-acc math)
    ref_Qs, ref_Ds = reference_forward(x, action_mask, params,
                                       SALES_BLEND_LENS, use_bf16=True)
    for got, ref in list(zip(allQs, ref_Qs)) + list(zip(allDeltas, ref_Ds)):
        got = np.asarray(got)
        ref = np.asarray(ref)
        gf, rf = np.isfinite(got), np.isfinite(ref)
        assert np.array_equal(gf, rf), "finite/masked structure mismatch"
        assert np.allclose(got[gf], ref[rf], rtol=1e-2, atol=1e-2), "value mismatch"

    # TODO(synk): the epsilon-greedy act() (python random / list filtering) and
    # AutoClip are host-side control logic, not part of the forward pass.
    print("KERNEL_OK")
</pallas_src>

<mosaic_0001>
module attributes {stable_mosaic.version = 11 : i64} {
  func.func @_dqn_kernel(%arg0: i32, %arg1: memref<8x32xbf16, #tpu.memory_space<vmem>>, %arg2: memref<8x8xf32, #tpu.memory_space<vmem>>, %arg3: memref<8x256xf32, #tpu.memory_space<vmem>>, %arg4: memref<1x256xf32, #tpu.memory_space<vmem>>, %arg5: memref<32x128xbf16, #tpu.memory_space<vmem>>, %arg6: memref<1x128xf32, #tpu.memory_space<vmem>>, %arg7: memref<128x64xbf16, #tpu.memory_space<vmem>>, %arg8: memref<1x64xf32, #tpu.memory_space<vmem>>, %arg9: memref<64x64xbf16, #tpu.memory_space<vmem>>, %arg10: memref<1x64xf32, #tpu.memory_space<vmem>>, %arg11: memref<64x256xbf16, #tpu.memory_space<vmem>>, %arg12: memref<1x256xf32, #tpu.memory_space<vmem>>, %arg13: memref<128x128xbf16, #tpu.memory_space<vmem>>, %arg14: memref<1x128xf32, #tpu.memory_space<vmem>>, %arg15: memref<8x128xf32, #tpu.memory_space<vmem>>) attributes {dimension_semantics = [#tpu.dimension_semantics<parallel>], iteration_bounds = array<i64: 1>, scalar_prefetch = 0 : i64, scratch_operands = 0 : i64, tpu.core_type = #tpu.core_type<tc>, window_params = [{transform_indices = @transform_0, window_bounds = array<i64: 8, 32>}, {transform_indices = @transform_1, window_bounds = array<i64: 8, 8>}, {pipeline_mode = #tpu.pipeline_mode<synchronous>, transform_indices = @transform_2, window_bounds = array<i64: 8, 256>}, {pipeline_mode = #tpu.pipeline_mode<synchronous>, transform_indices = @transform_3, window_bounds = array<i64: 1, 256>}, {pipeline_mode = #tpu.pipeline_mode<synchronous>, transform_indices = @transform_4, window_bounds = array<i64: 32, 128>}, {pipeline_mode = #tpu.pipeline_mode<synchronous>, transform_indices = @transform_5, window_bounds = array<i64: 1, 128>}, {pipeline_mode = #tpu.pipeline_mode<synchronous>, transform_indices = @transform_6, window_bounds = array<i64: 128, 64>}, {pipeline_mode = #tpu.pipeline_mode<synchronous>, transform_indices = @transform_7, window_bounds = array<i64: 1, 64>}, {pipeline_mode = #tpu.pipeline_mode<synchronous>, transform_indices = @transform_8, window_bounds = array<i64: 64, 64>}, {pipeline_mode = #tpu.pipeline_mode<synchronous>, transform_indices = @transform_9, window_bounds = array<i64: 1, 64>}, {pipeline_mode = #tpu.pipeline_mode<synchronous>, transform_indices = @transform_10, window_bounds = array<i64: 64, 256>}, {pipeline_mode = #tpu.pipeline_mode<synchronous>, transform_indices = @transform_11, window_bounds = array<i64: 1, 256>}, {pipeline_mode = #tpu.pipeline_mode<synchronous>, transform_indices = @transform_12, window_bounds = array<i64: 128, 128>}, {pipeline_mode = #tpu.pipeline_mode<synchronous>, transform_indices = @transform_13, window_bounds = array<i64: 1, 128>}, {transform_indices = @transform_14, window_bounds = array<i64: 8, 128>}]} {
    %c0 = arith.constant 0 : index
    %c0_0 = arith.constant 0 : index
    %0 = vector.load %arg1[%c0, %c0_0] : memref<8x32xbf16, #tpu.memory_space<vmem>>, vector<8x32xbf16>
    %c0_1 = arith.constant 0 : index
    %c0_2 = arith.constant 0 : index
    %1 = vector.load %arg5[%c0_1, %c0_2] : memref<32x128xbf16, #tpu.memory_space<vmem>>, vector<32x128xbf16>
    %cst = arith.constant dense<0.000000e+00> : vector<8x128xf32>
    %2 = tpu.matmul %0, %1, %cst {dimension_numbers = #tpu.dot_dimension_numbers<[1], [0], [0], [1], [0, 0, 1, 1], [], []>} : vector<8x32xbf16>, vector<32x128xbf16>, vector<8x128xf32> -> vector<8x128xf32>
    %c0_3 = arith.constant 0 : index
    %c0_4 = arith.constant 0 : index
    %3 = vector.load %arg6[%c0_3, %c0_4] : memref<1x128xf32, #tpu.memory_space<vmem>>, vector<1x128xf32>
    %4 = vector.broadcast %3 : vector<1x128xf32> to vector<8x128xf32>
    %5 = arith.addf %2, %4 : vector<8x128xf32>
    %cst_5 = arith.constant 0.000000e+00 : f32
    %6 = vector.broadcast %cst_5 : f32 to vector<8x128xf32>
    %7 = arith.maximumf %5, %6 : vector<8x128xf32>
    %8 = arith.truncf %7 : vector<8x128xf32> to vector<8x128xbf16>
    %c0_6 = arith.constant 0 : index
    %c0_7 = arith.constant 0 : index
    %9 = vector.load %arg7[%c0_6, %c0_7] : memref<128x64xbf16, #tpu.memory_space<vmem>>, vector<128x64xbf16>
    %cst_8 = arith.constant dense<0.000000e+00> : vector<8x64xf32>
    %10 = tpu.matmul %8, %9, %cst_8 {dimension_numbers = #tpu.dot_dimension_numbers<[1], [0], [0], [1], [0, 0, 1, 1], [], []>} : vector<8x128xbf16>, vector<128x64xbf16>, vector<8x64xf32> -> vector<8x64xf32>
    %c0_9 = arith.constant 0 : index
    %c0_10 = arith.constant 0 : index
    %11 = vector.load %arg8[%c0_9, %c0_10] : memref<1x64xf32, #tpu.memory_space<vmem>>, vector<1x64xf32>
    %12 = vector.broadcast %11 : vector<1x64xf32> to vector<8x64xf32>
    %13 = arith.addf %10, %12 : vector<8x64xf32>
    %cst_11 = arith.constant 0.000000e+00 : f32
    %14 = vector.broadcast %cst_11 : f32 to vector<8x64xf32>
    %15 = arith.maximumf %13, %14 : vector<8x64xf32>
    %16 = arith.truncf %15 : vector<8x64xf32> to vector<8x64xbf16>
    %c0_12 = arith.constant 0 : index
    %c0_13 = arith.constant 0 : index
    %17 = vector.load %arg9[%c0_12, %c0_13] : memref<64x64xbf16, #tpu.memory_space<vmem>>, vector<64x64xbf16>
    %cst_14 = arith.constant dense<0.000000e+00> : vector<8x64xf32>
    %18 = tpu.matmul %16, %17, %cst_14 {dimension_numbers = #tpu.dot_dimension_numbers<[1], [0], [0], [1], [0, 0, 1, 1], [], []>} : vector<8x64xbf16>, vector<64x64xbf16>, vector<8x64xf32> -> vector<8x64xf32>
    %c0_15 = arith.constant 0 : index
    %c0_16 = arith.constant 0 : index
    %19 = vector.load %arg10[%c0_15, %c0_16] : memref<1x64xf32, #tpu.memory_space<vmem>>, vector<1x64xf32>
    %20 = vector.broadcast %19 : vector<1x64xf32> to vector<8x64xf32>
    %21 = arith.addf %18, %20 : vector<8x64xf32>
    %cst_17 = arith.constant 0.000000e+00 : f32
    %22 = vector.broadcast %cst_17 : f32 to vector<8x64xf32>
    %23 = arith.maximumf %21, %22 : vector<8x64xf32>
    %24 = arith.truncf %23 : vector<8x64xf32> to vector<8x64xbf16>
    %c0_18 = arith.constant 0 : index
    %c0_19 = arith.constant 0 : index
    %25 = vector.load %arg11[%c0_18, %c0_19] : memref<64x256xbf16, #tpu.memory_space<vmem>>, vector<64x256xbf16>
    %cst_20 = arith.constant dense<0.000000e+00> : vector<8x256xf32>
    %26 = tpu.matmul %24, %25, %cst_20 {dimension_numbers = #tpu.dot_dimension_numbers<[1], [0], [0], [1], [0, 0, 1, 1], [], []>} : vector<8x64xbf16>, vector<64x256xbf16>, vector<8x256xf32> -> vector<8x256xf32>
    %c0_21 = arith.constant 0 : index
    %c0_22 = arith.constant 0 : index
    %27 = vector.load %arg12[%c0_21, %c0_22] : memref<1x256xf32, #tpu.memory_space<vmem>>, vector<1x256xf32>
    %28 = vector.broadcast %27 : vector<1x256xf32> to vector<8x256xf32>
    %29 = arith.addf %26, %28 : vector<8x256xf32>
    %30 = vector.extract_strided_slice %29 {offsets = [0, 0], sizes = [8, 128], strides = [1, 1]} : vector<8x256xf32> to vector<8x128xf32>
    %31 = vector.extract_strided_slice %29 {offsets = [0, 128], sizes = [8, 128], strides = [1, 1]} : vector<8x256xf32> to vector<8x128xf32>
    %cst_23 = arith.constant 0.000000e+00 : f32
    %32 = vector.broadcast %cst_23 : f32 to vector<8x128xf32>
    %33 = arith.maximumf %31, %32 : vector<8x128xf32>
    %34 = arith.truncf %33 : vector<8x128xf32> to vector<8x128xbf16>
    %c0_24 = arith.constant 0 : index
    %c0_25 = arith.constant 0 : index
    %35 = vector.load %arg13[%c0_24, %c0_25] : memref<128x128xbf16, #tpu.memory_space<vmem>>, vector<128x128xbf16>
    %cst_26 = arith.constant dense<0.000000e+00> : vector<8x128xf32>
    %36 = tpu.matmul %34, %35, %cst_26 {dimension_numbers = #tpu.dot_dimension_numbers<[1], [0], [0], [1], [0, 0, 1, 1], [], []>} : vector<8x128xbf16>, vector<128x128xbf16>, vector<8x128xf32> -> vector<8x128xf32>
    %c0_27 = arith.constant 0 : index
    %c0_28 = arith.constant 0 : index
    %37 = vector.load %arg14[%c0_27, %c0_28] : memref<1x128xf32, #tpu.memory_space<vmem>>, vector<1x128xf32>
    %38 = vector.broadcast %37 : vector<1x128xf32> to vector<8x128xf32>
    %39 = arith.addf %36, %38 : vector<8x128xf32>
    %c0_29 = arith.constant 0 : index
    %c0_30 = arith.constant 0 : index
    %40 = vector.load %arg2[%c0_29, %c0_30] : memref<8x8xf32, #tpu.memory_space<vmem>>, vector<8x8xf32>
    %c0_31 = arith.constant 0 : index
    %c0_32 = arith.constant 0 : index
    %41 = vector.load %arg3[%c0_31, %c0_32] : memref<8x256xf32, #tpu.memory_space<vmem>>, vector<8x256xf32>
    %cst_33 = arith.constant dense<0.000000e+00> : vector<8x256xf32>
    %42 = tpu.matmul %40, %41, %cst_33 {dimension_numbers = #tpu.dot_dimension_numbers<[1], [0], [0], [1], [0, 0, 1, 1], [], []>} : vector<8x8xf32>, vector<8x256xf32>, vector<8x256xf32> -> vector<8x256xf32>
    %c0_34 = arith.constant 0 : index
    %c0_35 = arith.constant 0 : index
    %43 = vector.load %arg4[%c0_34, %c0_35] : memref<1x256xf32, #tpu.memory_space<vmem>>, vector<1x256xf32>
    %44 = vector.broadcast %43 : vector<1x256xf32> to vector<8x256xf32>
    %45 = arith.cmpf oeq, %42, %44 : vector<8x256xf32>
    %cst_36 = arith.constant -3.400000e+38 : f32
    %cst_37 = arith.constant 0.000000e+00 : f32
    %46 = vector.broadcast %cst_36 : f32 to vector<8x256xf32>
    %47 = vector.broadcast %cst_37 : f32 to vector<8x256xf32>
    %48 = arith.select %45, %46, %47 : vector<8x256xi1>, vector<8x256xf32>
    %49 = vector.extract_strided_slice %48 {offsets = [0, 0], sizes = [8, 128], strides = [1, 1]} : vector<8x256xf32> to vector<8x128xf32>
    %50 = vector.extract_strided_slice %48 {offsets = [0, 128], sizes = [8, 128], strides = [1, 1]} : vector<8x256xf32> to vector<8x128xf32>
    %51 = arith.addf %49, %50 : vector<8x128xf32>
    %52 = arith.addf %30, %39 : vector<8x128xf32>
    %53 = arith.addf %52, %51 : vector<8x128xf32>
    %c0_38 = arith.constant 0 : index
    %c0_39 = arith.constant 0 : index
    %54 = vector.load %arg15[%c0_38, %c0_39] : memref<8x128xf32, #tpu.memory_space<vmem>>, vector<8x128xf32>
    tpu.vector_store %arg15[%c0_38, %c0_39], %53 {strides = array<i32>} : memref<8x128xf32, #tpu.memory_space<vmem>>, vector<8x128xf32>,
    return
  }
  func.func @transform_0(%arg0: i32) -> (i32, i32) {
    %c0_i32 = arith.constant 0 : i32
    %c0_i32_0 = arith.constant 0 : i32
    return %arg0, %c0_i32 : i32, i32
  }
  func.func @transform_1(%arg0: i32) -> (i32, i32) {
    %c0_i32 = arith.constant 0 : i32
    %c0_i32_0 = arith.constant 0 : i32
    return %arg0, %c0_i32 : i32, i32
  }
  func.func @transform_2(%arg0: i32) -> (i32, i32) {
    %c0_i32 = arith.constant 0 : i32
    %c0_i32_0 = arith.constant 0 : i32
    %c0_i32_1 = arith.constant 0 : i32
    return %c0_i32, %c0_i32_0 : i32, i32
  }
  func.func @transform_3(%arg0: i32) -> (i32, i32) {
    %c0_i32 = arith.constant 0 : i32
    %c0_i32_0 = arith.constant 0 : i32
    %c0_i32_1 = arith.constant 0 : i32
    return %c0_i32, %c0_i32_0 : i32, i32
  }
  func.func @transform_4(%arg0: i32) -> (i32, i32) {
    %c0_i32 = arith.constant 0 : i32
    %c0_i32_0 = arith.constant 0 : i32
    %c0_i32_1 = arith.constant 0 : i32
    return %c0_i32, %c0_i32_0 : i32, i32
  }
  func.func @transform_5(%arg0: i32) -> (i32, i32) {
    %c0_i32 = arith.constant 0 : i32
    %c0_i32_0 = arith.constant 0 : i32
    %c0_i32_1 = arith.constant 0 : i32
    return %c0_i32, %c0_i32_0 : i32, i32
  }
  func.func @transform_6(%arg0: i32) -> (i32, i32) {
    %c0_i32 = arith.constant 0 : i32
    %c0_i32_0 = arith.constant 0 : i32
    %c0_i32_1 = arith.constant 0 : i32
    return %c0_i32, %c0_i32_0 : i32, i32
  }
  func.func @transform_7(%arg0: i32) -> (i32, i32) {
    %c0_i32 = arith.constant 0 : i32
    %c0_i32_0 = arith.constant 0 : i32
    %c0_i32_1 = arith.constant 0 : i32
    return %c0_i32, %c0_i32_0 : i32, i32
  }
  func.func @transform_8(%arg0: i32) -> (i32, i32) {
    %c0_i32 = arith.constant 0 : i32
    %c0_i32_0 = arith.constant 0 : i32
    %c0_i32_1 = arith.constant 0 : i32
    return %c0_i32, %c0_i32_0 : i32, i32
  }
  func.func @transform_9(%arg0: i32) -> (i32, i32) {
    %c0_i32 = arith.constant 0 : i32
    %c0_i32_0 = arith.constant 0 : i32
    %c0_i32_1 = arith.constant 0 : i32
    return %c0_i32, %c0_i32_0 : i32, i32
  }
  func.func @transform_10(%arg0: i32) -> (i32, i32) {
    %c0_i32 = arith.constant 0 : i32
    %c0_i32_0 = arith.constant 0 : i32
    %c0_i32_1 = arith.constant 0 : i32
    return %c0_i32, %c0_i32_0 : i32, i32
  }
  func.func @transform_11(%arg0: i32) -> (i32, i32) {
    %c0_i32 = arith.constant 0 : i32
    %c0_i32_0 = arith.constant 0 : i32
    %c0_i32_1 = arith.constant 0 : i32
    return %c0_i32, %c0_i32_0 : i32, i32
  }
  func.func @transform_12(%arg0: i32) -> (i32, i32) {
    %c0_i32 = arith.constant 0 : i32
    %c0_i32_0 = arith.constant 0 : i32
    %c0_i32_1 = arith.constant 0 : i32
    return %c0_i32, %c0_i32_0 : i32, i32
  }
  func.func @transform_13(%arg0: i32) -> (i32, i32) {
    %c0_i32 = arith.constant 0 : i32
    %c0_i32_0 = arith.constant 0 : i32
    %c0_i32_1 = arith.constant 0 : i32
    return %c0_i32, %c0_i32_0 : i32, i32
  }
  func.func @transform_14(%arg0: i32) -> (i32, i32) {
    %c0_i32 = arith.constant 0 : i32
    %c0_i32_0 = arith.constant 0 : i32
    return %arg0, %c0_i32 : i32, i32
  }
}

</mosaic_0001>

<llo_original>
// kernel: _lambda_.1
$region0: #{_lambda_.1}
  #allocation0 [shape = 'u32[]', space=smem, size = 0x4, offset = 0x4, fixed_abs, tag = 'smem constant byte address 0x4 - core index']
  #allocation1 [shape = 'u32[72,128]{1,0:T(1,128)}', space=vmem, size = 0x9000, scoped, tag = 'internal scratch']
  %s0 = inlined_call_operand.vmem [shape: bf16[8,32], index: 0, kind: input, shape index: {}]
  %s1 = inlined_call_operand.vmem [shape: f32[8,8], index: 1, kind: input, shape index: {}]
  %s2 = inlined_call_operand.vmem [shape: f32[8,256], index: 2, kind: input, shape index: {}]
  %s3 = inlined_call_operand.hbm [shape: f32[1,256], index: 3, kind: input, shape index: {}]
  %s4 = inlined_call_operand.hbm [shape: bf16[32,128], index: 4, kind: input, shape index: {}]
  %s5 = inlined_call_operand.hbm [shape: f32[1,128], index: 5, kind: input, shape index: {}]
  %s6 = inlined_call_operand.vmem [shape: bf16[128,64], index: 6, kind: input, shape index: {}]
  %s7 = inlined_call_operand.hbm [shape: f32[1,64], index: 7, kind: input, shape index: {}]
  %s8 = inlined_call_operand.vmem [shape: bf16[64,64], index: 8, kind: input, shape index: {}]
  %s9 = inlined_call_operand.hbm [shape: f32[1,64], index: 9, kind: input, shape index: {}]
  %s10 = inlined_call_operand.vmem [shape: bf16[64,256], index: 10, kind: input, shape index: {}]
  %s11 = inlined_call_operand.hbm [shape: f32[1,256], index: 11, kind: input, shape index: {}]
  %s12 = inlined_call_operand.hbm [shape: bf16[128,128], index: 12, kind: input, shape index: {}]
  %s13 = inlined_call_operand.hbm [shape: f32[1,128], index: 13, kind: input, shape index: {}]
  %s14 = inlined_call_operand.vmem [shape: f32[8,128], index: 14, kind: output, shape index: {}]
  %s15 = sld [smem:[#allocation0]]
  $region98: #{_lambda_.1} parent=0
    _
  %s17 = ssub.s32 1, %s15
  %s18 = scalar_select 0, %s17, %s15
  $region1: #{_lambda_.1} parent=0
    #allocation2 [shape = 'u8[1024]{0}', space=vmem, size = 0x400, scoped, tag = 'input window, operand 3, single buffered']
    #allocation3 [shape = 's32[1]{0}', space=sflag, size = 0x4, scoped, tag = 'scoped memory for _lambda_.1']
    #allocation4 [shape = 'u8[8192]{0}', space=vmem, size = 0x2000, scoped, tag = 'input window, operand 4, single buffered']
    #allocation5 [shape = 's32[1]{0}', space=sflag, size = 0x4, scoped, tag = 'scoped memory for _lambda_.1']
    #allocation6 [shape = 'u8[512]{0}', space=vmem, size = 0x400, scoped, tag = 'input window, operand 5, single buffered']
    #allocation7 [shape = 'u8[512]{0}', space=vmem, size = 0x400, scoped, tag = 'input window, operand 7, single buffered']
    #allocation8 [shape = 's32[1]{0}', space=sflag, size = 0x4, scoped, tag = 'scoped memory for _lambda_.1']
    #allocation9 [shape = 'u8[512]{0}', space=vmem, size = 0x400, scoped, tag = 'input window, operand 9, single buffered']
    #allocation10 [shape = 'u8[1024]{0}', space=vmem, size = 0x400, scoped, tag = 'input window, operand 11, single buffered']
    #allocation11 [shape = 's32[1]{0}', space=sflag, size = 0x4, scoped, tag = 'scoped memory for _lambda_.1']
    #allocation12 [shape = 'u8[32768]{0}', space=vmem, size = 0x8000, scoped, tag = 'input window, operand 12, single buffered']
    #allocation13 [shape = 'u8[512]{0}', space=vmem, size = 0x400, scoped, tag = 'input window, operand 13, single buffered']
    #allocation14 [shape = 's32[1]{0}', space=sflag, size = 0x4, scoped, tag = 'scoped memory for _lambda_.1']
    %19 = vsyncpa [#allocation3], 0
    %20 = vsyncpa [#allocation5], 0
    %21 = vsyncpa [#allocation8], 0
    %22 = vsyncpa [#allocation11], 0
    %23 = vsyncpa [#allocation14], 0
    // Predicated region
    $region2: #{_lambda_.1} parent=1 // pred_check
      _
    $region3: #{_lambda_.1} parent=1 // pred_check_branch
      %25 = sbr.rel (0) target = $region5
    $region4: #{_lambda_.1} parent=1 // pred_region
      _
    $region5: #{_lambda_.1} parent=1 // pred_fallthru
      _
    // Predicated region
    $region6: #{_lambda_.1} parent=1 // pred_check
      _
    $region7: #{_lambda_.1} parent=1 // pred_check_branch
      %27 = sbr.rel (0) target = $region9
    $region8: #{_lambda_.1} parent=1 // pred_region
      _
    $region9: #{_lambda_.1} parent=1 // pred_fallthru
      _
    // Predicated region
    $region10: #{_lambda_.1} parent=1 // pred_check
      _
    $region11: #{_lambda_.1} parent=1 // pred_check_branch
      %29 = sbr.rel (0) target = $region13
    $region12: #{_lambda_.1} parent=1 // pred_region
      _
    $region13: #{_lambda_.1} parent=1 // pred_fallthru
      _
    // Predicated region
    $region14: #{_lambda_.1} parent=1 // pred_check
      _
    $region15: #{_lambda_.1} parent=1 // pred_check_branch
      %31 = sbr.rel (0) target = $region17
    $region16: #{_lambda_.1} parent=1 // pred_region
      %33 = vsyncadd [#allocation3], 0
      %s35 = sshll.u32 %s3, 4
      %s36 = int_to_ptr.hbm [resolvable:$true] %s35
      %s37 = sshll.u32 [#allocation2], 4
      %s38 = int_to_ptr.vmem [resolvable:$true] %s37
      %40 = dma.hbm_to_vmem [thread:$0]  %s36, 32, %s38, [#allocation3]
    $region17: #{_lambda_.1} parent=1 // pred_fallthru
      _
    // Predicated region
    $region18: #{_lambda_.1} parent=1 // pred_check
      _
    $region19: #{_lambda_.1} parent=1 // pred_check_branch
      %42 = sbr.rel (0) target = $region21
    $region20: #{_lambda_.1} parent=1 // pred_region
      %44 = vsyncadd [#allocation5], 0
      %s45 = sshll.u32 %s4, 4
      %s46 = int_to_ptr.hbm [resolvable:$true] %s45
      %s47 = sshll.u32 [#allocation4], 4
      %s48 = int_to_ptr.vmem [resolvable:$true] %s47
      %53 = dma.hbm_to_vmem [thread:$0]  %s46, 256, %s48, [#allocation5], 64, 64, 4
    $region21: #{_lambda_.1} parent=1 // pred_fallthru
      _
    // Predicated region
    $region22: #{_lambda_.1} parent=1 // pred_check
      _
    $region23: #{_lambda_.1} parent=1 // pred_check_branch
      %55 = sbr.rel (0) target = $region25
    $region24: #{_lambda_.1} parent=1 // pred_region
      %57 = vsyncadd [#allocation5], 0
      %s59 = sshll.u32 %s5, 4
      %s60 = int_to_ptr.hbm [resolvable:$true] %s59
      %s61 = sshll.u32 [#allocation6], 4
      %s62 = int_to_ptr.vmem [resolvable:$true] %s61
      %64 = dma.hbm_to_vmem [thread:$0]  %s60, 16, %s62, [#allocation5]
    $region25: #{_lambda_.1} parent=1 // pred_fallthru
      _
    // Predicated region
    $region26: #{_lambda_.1} parent=1 // pred_check
      _
    $region27: #{_lambda_.1} parent=1 // pred_check_branch
      %66 = sbr.rel (0) target = $region29
    $region28: #{_lambda_.1} parent=1 // pred_region
      _
    $region29: #{_lambda_.1} parent=1 // pred_fallthru
      _
    // Predicated region
    $region30: #{_lambda_.1} parent=1 // pred_check
      _
    $region31: #{_lambda_.1} parent=1 // pred_check_branch
      %68 = sbr.rel (0) target = $region33
    $region32: #{_lambda_.1} parent=1 // pred_region
      %70 = vsyncadd [#allocation8], 0
      %s72 = sshll.u32 %s7, 4
      %s73 = int_to_ptr.hbm [resolvable:$true] %s72
      %s74 = sshll.u32 [#allocation7], 4
      %s75 = int_to_ptr.vmem [resolvable:$true] %s74
      %77 = dma.hbm_to_vmem [thread:$0]  %s73, 16, %s75, [#allocation8]
    $region33: #{_lambda_.1} parent=1 // pred_fallthru
      _
    // Predicated region
    $region34: #{_lambda_.1} parent=1 // pred_check
      _
    $region35: #{_lambda_.1} parent=1 // pred_check_branch
      %79 = sbr.rel (0) target = $region37
    $region36: #{_lambda_.1} parent=1 // pred_region
      _
    $region37: #{_lambda_.1} parent=1 // pred_fallthru
      _
    // Predicated region
    $region38: #{_lambda_.1} parent=1 // pred_check
      _
    $region39: #{_lambda_.1} parent=1 // pred_check_branch
      %81 = sbr.rel (0) target = $region41
    $region40: #{_lambda_.1} parent=1 // pred_region
      %83 = vsyncadd [#allocation8], 0
      %s85 = sshll.u32 %s9, 4
      %s86 = int_to_ptr.hbm [resolvable:$true] %s85
      %s87 = sshll.u32 [#allocation9], 4
      %s88 = int_to_ptr.vmem [resolvable:$true] %s87
      %90 = dma.hbm_to_vmem [thread:$0]  %s86, 16, %s88, [#allocation8]
    $region41: #{_lambda_.1} parent=1 // pred_fallthru
      _
    // Predicated region
    $region42: #{_lambda_.1} parent=1 // pred_check
      _
    $region43: #{_lambda_.1} parent=1 // pred_check_branch
      %92 = sbr.rel (0) target = $region45
    $region44: #{_lambda_.1} parent=1 // pred_region
      _
    $region45: #{_lambda_.1} parent=1 // pred_fallthru
      _
    // Predicated region
    $region46: #{_lambda_.1} parent=1 // pred_check
      _
    $region47: #{_lambda_.1} parent=1 // pred_check_branch
      %94 = sbr.rel (0) target = $region49
    $region48: #{_lambda_.1} parent=1 // pred_region
      %96 = vsyncadd [#allocation11], 0
      %s98 = sshll.u32 %s11, 4
      %s99 = int_to_ptr.hbm [resolvable:$true] %s98
      %s100 = sshll.u32 [#allocation10], 4
      %s101 = int_to_ptr.vmem [resolvable:$true] %s100
      %103 = dma.hbm_to_vmem [thread:$0]  %s99, 32, %s101, [#allocation11]
    $region49: #{_lambda_.1} parent=1 // pred_fallthru
      _
    // Predicated region
    $region50: #{_lambda_.1} parent=1 // pred_check
      _
    $region51: #{_lambda_.1} parent=1 // pred_check_branch
      %105 = sbr.rel (0) target = $region53
    $region52: #{_lambda_.1} parent=1 // pred_region
      %107 = vsyncadd [#allocation11], 0
      %s108 = sshll.u32 %s12, 4
      %s109 = int_to_ptr.hbm [resolvable:$true] %s108
      %s110 = sshll.u32 [#allocation12], 4
      %s111 = int_to_ptr.vmem [resolvable:$true] %s110
      %116 = dma.hbm_to_vmem [thread:$0]  %s109, 1024, %s111, [#allocation11], 64, 64, 4
    $region53: #{_lambda_.1} parent=1 // pred_fallthru
      _
    // Predicated region
    $region54: #{_lambda_.1} parent=1 // pred_check
      _
    $region55: #{_lambda_.1} parent=1 // pred_check_branch
      %118 = sbr.rel (0) target = $region57
    $region56: #{_lambda_.1} parent=1 // pred_region
      %120 = vsyncadd [#allocation14], 0
      %s122 = sshll.u32 %s13, 4
      %s123 = int_to_ptr.hbm [resolvable:$true] %s122
      %s124 = sshll.u32 [#allocation13], 4
      %s125 = int_to_ptr.vmem [resolvable:$true] %s124
      %127 = dma.hbm_to_vmem [thread:$0]  %s123, 16, %s125, [#allocation14]
    $region57: #{_lambda_.1} parent=1 // pred_fallthru
      _
    // Predicated region
    $region58: #{_lambda_.1} parent=1 // pred_check
      _
    $region59: #{_lambda_.1} parent=1 // pred_check_branch
      %129 = sbr.rel (0) target = $region61
    $region60: #{_lambda_.1} parent=1 // pred_region
      %131 = dma.done [#allocation3], 32
    $region61: #{_lambda_.1} parent=1 // pred_fallthru
      _
    // Predicated region
    $region62: #{_lambda_.1} parent=1 // pred_check
      _
    $region63: #{_lambda_.1} parent=1 // pred_check_branch
      %133 = sbr.rel (0) target = $region65
    $region64: #{_lambda_.1} parent=1 // pred_region
      %135 = dma.done [#allocation5], 256
    $region65: #{_lambda_.1} parent=1 // pred_fallthru
      _
    // Predicated region
    $region66: #{_lambda_.1} parent=1 // pred_check
      _
    $region67: #{_lambda_.1} parent=1 // pred_check_branch
      %137 = sbr.rel (0) target = $region69
    $region68: #{_lambda_.1} parent=1 // pred_region
      %139 = dma.done [#allocation5], 16
    $region69: #{_lambda_.1} parent=1 // pred_fallthru
      _
    // Predicated region
    $region70: #{_lambda_.1} parent=1 // pred_check
      _
    $region71: #{_lambda_.1} parent=1 // pred_check_branch
      %141 = sbr.rel (0) target = $region73
    $region72: #{_lambda_.1} parent=1 // pred_region
      %143 = dma.done [#allocation8], 16
    $region73: #{_lambda_.1} parent=1 // pred_fallthru
      _
    // Predicated region
    $region74: #{_lambda_.1} parent=1 // pred_check
      _
    $region75: #{_lambda_.1} parent=1 // pred_check_branch
      %145 = sbr.rel (0) target = $region77
    $region76: #{_lambda_.1} parent=1 // pred_region
      %147 = dma.done [#allocation8], 16
    $region77: #{_lambda_.1} parent=1 // pred_fallthru
      _
    // Predicated region
    $region78: #{_lambda_.1} parent=1 // pred_check
      _
    $region79: #{_lambda_.1} parent=1 // pred_check_branch
      %149 = sbr.rel (0) target = $region81
    $region80: #{_lambda_.1} parent=1 // pred_region
      %151 = dma.done [#allocation11], 32
    $region81: #{_lambda_.1} parent=1 // pred_fallthru
      _
    // Predicated region
    $region82: #{_lambda_.1} parent=1 // pred_check
      _
    $region83: #{_lambda_.1} parent=1 // pred_check_branch
      %153 = sbr.rel (0) target = $region85
    $region84: #{_lambda_.1} parent=1 // pred_region
      %155 = dma.done [#allocation11], 1024
    $region85: #{_lambda_.1} parent=1 // pred_fallthru
      _
    // Predicated region
    $region86: #{_lambda_.1} parent=1 // pred_check
      _
    $region87: #{_lambda_.1} parent=1 // pred_check_branch
      %157 = sbr.rel (0) target = $region89
    $region88: #{_lambda_.1} parent=1 // pred_region
      %159 = dma.done [#allocation14], 16
    $region89: #{_lambda_.1} parent=1 // pred_fallthru
      _
    %v161 = vld [vmem:[%s0] sm:$0xf]
    %v162 = vld [vmem:[#allocation4] sm:$0xf]
    %v163 = vld [vmem:[#allocation4 + $0x4] sm:$0xf]
    %v164 = vld [vmem:[#allocation4 + $0x8] sm:$0xf]
    %v165 = vld [vmem:[#allocation4 + $0xc] sm:$0xf]
    %v166 = vld [vmem:[#allocation6] sm:$0x1]
    %v168 = vperm.slane %v166, 0
    %v174 = vunpack.c.l.b16 %v162
    %v175 = vunpack.c.l.b16 %v163
    %v176 = vunpack.c.l.b16 %v164
    %v177 = vunpack.c.l.b16 %v165
    %v178 = vpack.c.b16 %v175, %v174
    %v179 = vpack.c.b16 %v177, %v176
    %vm182 = vcmask 261120
    %v184 = vsel %vm182, %v161, 0
    %186 = vmatpush.bf16.msra.mxu0 0
    %187 = vmatpush.bf16.msra.mxu0 0
    %188 = vmatpush.bf16.msra.mxu0 0
    %189 = vmatpush.bf16.msra.mxu0 0
    %190 = vmatpush.bf16.msra.mxu0 0
    %191 = vmatpush.bf16.msra.mxu0 0
    %192 = vmatpush.bf16.msra.mxu0 %v179
    %193 = vmatpush.bf16.msra.mxu0 %v178
    %194 = vmatmul.bf16.gmra.mxu0 %v184
    %v195 = vpop.f32.mrf.mxu0
    %v196 = vadd.f32 %v168, %v195
    %v197 = vpop.f32.mrf.mxu0
    %198 = vdwg.mxu0
    %v199 = vmax.f32 %v196, 0.0
    %v200 = vpack.c.bf16 %v199, %v199
    %v201 = vld [vmem:[%s6] sm:$0xf]
    %v202 = vld [vmem:[%s6 + $0x4] sm:$0xf]
    %v203 = vld [vmem:[%s6 + $0x8] sm:$0xf]
    %v204 = vld [vmem:[%s6 + $0xc] sm:$0xf]
    %v205 = vld [vmem:[%s6 + $0x10] sm:$0xf]
    %v206 = vld [vmem:[%s6 + $0x14] sm:$0xf]
    %v207 = vld [vmem:[%s6 + $0x18] sm:$0xf]
    %v208 = vld [vmem:[%s6 + $0x1c] sm:$0xf]
    %v209 = vld [vmem:[%s6 + $0x20] sm:$0xf]
    %v210 = vld [vmem:[%s6 + $0x24] sm:$0xf]
    %v211 = vld [vmem:[%s6 + $0x28] sm:$0xf]
    %v212 = vld [vmem:[%s6 + $0x2c] sm:$0xf]
    %v213 = vld [vmem:[%s6 + $0x30] sm:$0xf]
    %v214 = vld [vmem:[%s6 + $0x34] sm:$0xf]
    %v215 = vld [vmem:[%s6 + $0x38] sm:$0xf]
    %v216 = vld [vmem:[%s6 + $0x3c] sm:$0xf]
    %v217 = vld [vmem:[#allocation7] sm:$0x1]
    %v219 = vperm.slane %v217, 0
    %v237 = vunpack.c.l.b16 %v201
    %v238 = vunpack.c.l.b16 %v202
    %v239 = vunpack.c.l.b16 %v203
    %v240 = vunpack.c.l.b16 %v204
    %v241 = vunpack.c.l.b16 %v205
    %v242 = vunpack.c.l.b16 %v206
    %v243 = vunpack.c.l.b16 %v207
    %v244 = vunpack.c.l.b16 %v208
    %v245 = vunpack.c.l.b16 %v209
    %v246 = vunpack.c.l.b16 %v210
    %v247 = vunpack.c.l.b16 %v211
    %v248 = vunpack.c.l.b16 %v212
    %v249 = vunpack.c.l.b16 %v213
    %v250 = vunpack.c.l.b16 %v214
    %v251 = vunpack.c.l.b16 %v215
    %v252 = vunpack.c.l.b16 %v216
    %v253 = vpack.c.b16 %v238, %v237
    %v254 = vpack.c.b16 %v240, %v239
    %v255 = vpack.c.b16 %v242, %v241
    %v256 = vpack.c.b16 %v244, %v243
    %v257 = vpack.c.b16 %v246, %v245
    %v258 = vpack.c.b16 %v248, %v247
    %v259 = vpack.c.b16 %v250, %v249
    %v260 = vpack.c.b16 %v252, %v251
    %269 = vmatpush.bf16.msra.mxu0 %v260
    %270 = vmatpush.bf16.msra.mxu0 %v259
    %271 = vmatpush.bf16.msra.mxu0 %v258
    %272 = vmatpush.bf16.msra.mxu0 %v257
    %273 = vmatpush.bf16.msra.mxu0 %v256
    %274 = vmatpush.bf16.msra.mxu0 %v255
    %275 = vmatpush.bf16.msra.mxu0 %v254
    %276 = vmatpush.bf16.msra.mxu0 %v253
    %277 = vmatmul.bf16.gmra.mxu0 %v200
    %v278 = vpop.f32.mrf.mxu0
    %v279 = vadd.f32 %v219, %v278
    %v280 = vpop.f32.mrf.mxu0
    %281 = vdwg.mxu0
    %v282 = vmax.f32 %v279, 0.0
    %v283 = vpack.c.bf16 %v282, %v282
    %v284 = vld [vmem:[%s8] sm:$0xf]
    %v285 = vld [vmem:[%s8 + $0x4] sm:$0xf]
    %v286 = vld [vmem:[%s8 + $0x8] sm:$0xf]
    %v287 = vld [vmem:[%s8 + $0xc] sm:$0xf]
    %v288 = vld [vmem:[%s8 + $0x10] sm:$0xf]
    %v289 = vld [vmem:[%s8 + $0x14] sm:$0xf]
    %v290 = vld [vmem:[%s8 + $0x18] sm:$0xf]
    %v291 = vld [vmem:[%s8 + $0x1c] sm:$0xf]
    %v292 = vld [vmem:[#allocation9] sm:$0x1]
    %v294 = vperm.slane %v292, 0
    %v304 = vunpack.c.l.b16 %v284
    %v305 = vunpack.c.l.b16 %v285
    %v306 = vunpack.c.l.b16 %v286
    %v307 = vunpack.c.l.b16 %v287
    %v308 = vunpack.c.l.b16 %v288
    %v309 = vunpack.c.l.b16 %v289
    %v310 = vunpack.c.l.b16 %v290
    %v311 = vunpack.c.l.b16 %v291
    %v312 = vpack.c.b16 %v305, %v304
    %v313 = vpack.c.b16 %v307, %v306
    %v314 = vpack.c.b16 %v309, %v308
    %v315 = vpack.c.b16 %v311, %v310
    %vm320 = vcmask 523264
    %v322 = vsel %vm320, %v283, 0
    %324 = vmatpush.bf16.msra.mxu0 0
    %325 = vmatpush.bf16.msra.mxu0 0
    %326 = vmatpush.bf16.msra.mxu0 0
    %327 = vmatpush.bf16.msra.mxu0 0
    %328 = vmatpush.bf16.msra.mxu0 %v315
    %329 = vmatpush.bf16.msra.mxu0 %v314
    %330 = vmatpush.bf16.msra.mxu0 %v313
    %331 = vmatpush.bf16.msra.mxu0 %v312
    %332 = vmatmul.bf16.gmra.mxu0 %v322
    %v333 = vpop.f32.mrf.mxu0
    %v334 = vadd.f32 %v294, %v333
    %v335 = vpop.f32.mrf.mxu0
    %336 = vdwg.mxu0
    %v337 = vmax.f32 %v334, 0.0
    %v338 = vpack.c.bf16 %v337, %v337
    %v339 = vld [vmem:[%s10] sm:$0xff]
    %v340 = vld [vmem:[%s10 + $0x8] sm:$0xff]
    %v341 = vld [vmem:[%s10 + $0x10] sm:$0xff]
    %v342 = vld [vmem:[%s10 + $0x18] sm:$0xff]
    %v343 = vld [vmem:[%s10 + $0x20] sm:$0xff]
    %v344 = vld [vmem:[%s10 + $0x28] sm:$0xff]
    %v345 = vld [vmem:[%s10 + $0x30] sm:$0xff]
    %v346 = vld [vmem:[%s10 + $0x38] sm:$0xff]
    %v347 = vld [vmem:[#allocation10] sm:$0x3]
    %v349 = vperm.slane %v347, 0
    %v350 = vperm.slane %v347, 1
    %v361 = vunpack.c.l.b16 %v339
    %v362 = vunpack.c.h.b16 %v339
    %v363 = vunpack.c.l.b16 %v340
    %v364 = vunpack.c.h.b16 %v340
    %v365 = vunpack.c.l.b16 %v341
    %v366 = vunpack.c.h.b16 %v341
    %v367 = vunpack.c.l.b16 %v342
    %v368 = vunpack.c.h.b16 %v342
    %v369 = vunpack.c.l.b16 %v343
    %v370 = vunpack.c.h.b16 %v343
    %v371 = vunpack.c.l.b16 %v344
    %v372 = vunpack.c.h.b16 %v344
    %v373 = vunpack.c.l.b16 %v345
    %v374 = vunpack.c.h.b16 %v345
    %v375 = vunpack.c.l.b16 %v346
    %v376 = vunpack.c.h.b16 %v346
    %v377 = vpack.c.b16 %v363, %v361
    %v378 = vpack.c.b16 %v364, %v362
    %v379 = vpack.c.b16 %v367, %v365
    %v380 = vpack.c.b16 %v368, %v366
    %v381 = vpack.c.b16 %v371, %v369
    %v382 = vpack.c.b16 %v372, %v370
    %v383 = vpack.c.b16 %v375, %v373
    %v384 = vpack.c.b16 %v376, %v374
    %v394 = vsel %vm320, %v338, 0
    %396 = vmatpush.bf16.msra.mxu0 0
    %397 = vmatpush.bf16.msra.mxu0 0
    %398 = vmatpush.bf16.msra.mxu0 0
    %399 = vmatpush.bf16.msra.mxu0 0
    %400 = vmatpush.bf16.msra.mxu0 %v383
    %401 = vmatpush.bf16.msra.mxu0 %v381
    %402 = vmatpush.bf16.msra.mxu0 %v379
    %403 = vmatpush.bf16.msra.mxu0 %v377
    %404 = vmatmul.bf16.gmra.mxu0 %v394
    %v405 = vpop.f32.mrf.mxu0
    %v406 = vadd.f32 %v349, %v405
    %v407 = vpop.f32.mrf.mxu0
    %408 = vdwg.mxu0
    %409 = vmatpush.bf16.msra.mxu0 0
    %410 = vmatpush.bf16.msra.mxu0 0
    %411 = vmatpush.bf16.msra.mxu0 0
    %412 = vmatpush.bf16.msra.mxu0 0
    %413 = vmatpush.bf16.msra.mxu0 %v384
    %414 = vmatpush.bf16.msra.mxu0 %v382
    %415 = vmatpush.bf16.msra.mxu0 %v380
    %416 = vmatpush.bf16.msra.mxu0 %v378
    %417 = vmatmul.bf16.gmra.mxu0 %v394
    %v418 = vpop.f32.mrf.mxu0
    %v419 = vadd.f32 %v350, %v418
    %v420 = vpop.f32.mrf.mxu0
    %421 = vdwg.mxu0
    %v422 = vmax.f32 %v419, 0.0
    %v423 = vpack.c.bf16 %v422, %v422
    %v424 = vld [vmem:[#allocation12] sm:$0xf]
    %v425 = vld [vmem:[#allocation12 + $0x4] sm:$0xf]
    %v426 = vld [vmem:[#allocation12 + $0x8] sm:$0xf]
    %v427 = vld [vmem:[#allocation12 + $0xc] sm:$0xf]
    %v428 = vld [vmem:[#allocation12 + $0x10] sm:$0xf]
    %v429 = vld [vmem:[#allocation12 + $0x14] sm:$0xf]
    %v430 = vld [vmem:[#allocation12 + $0x18] sm:$0xf]
    %v431 = vld [vmem:[#allocation12 + $0x1c] sm:$0xf]
    %v432 = vld [vmem:[#allocation12 + $0x20] sm:$0xf]
    %v433 = vld [vmem:[#allocation12 + $0x24] sm:$0xf]
    %v434 = vld [vmem:[#allocation12 + $0x28] sm:$0xf]
    %v435 = vld [vmem:[#allocation12 + $0x2c] sm:$0xf]
    %v436 = vld [vmem:[#allocation12 + $0x30] sm:$0xf]
    %v437 = vld [vmem:[#allocation12 + $0x34] sm:$0xf]
    %v438 = vld [vmem:[#allocation12 + $0x38] sm:$0xf]
    %v439 = vld [vmem:[#allocation12 + $0x3c] sm:$0xf]
    %v440 = vld [vmem:[#allocation13] sm:$0x1]
    %v442 = vperm.slane %v440, 0
    %v460 = vunpack.c.l.b16 %v424
    %v461 = vunpack.c.l.b16 %v425
    %v462 = vunpack.c.l.b16 %v426
    %v463 = vunpack.c.l.b16 %v427
    %v464 = vunpack.c.l.b16 %v428
    %v465 = vunpack.c.l.b16 %v429
    %v466 = vunpack.c.l.b16 %v430
    %v467 = vunpack.c.l.b16 %v431
    %v468 = vunpack.c.l.b16 %v432
    %v469 = vunpack.c.l.b16 %v433
    %v470 = vunpack.c.l.b16 %v434
    %v471 = vunpack.c.l.b16 %v435
    %v472 = vunpack.c.l.b16 %v436
    %v473 = vunpack.c.l.b16 %v437
    %v474 = vunpack.c.l.b16 %v438
    %v475 = vunpack.c.l.b16 %v439
    %v476 = vpack.c.b16 %v461, %v460
    %v477 = vpack.c.b16 %v463, %v462
    %v478 = vpack.c.b16 %v465, %v464
    %v479 = vpack.c.b16 %v467, %v466
    %v480 = vpack.c.b16 %v469, %v468
    %v481 = vpack.c.b16 %v471, %v470
    %v482 = vpack.c.b16 %v473, %v472
    %v483 = vpack.c.b16 %v475, %v474
    %492 = vmatpush.bf16.msra.mxu0 %v483
    %493 = vmatpush.bf16.msra.mxu0 %v482
    %494 = vmatpush.bf16.msra.mxu0 %v481
    %495 = vmatpush.bf16.msra.mxu0 %v480
    %496 = vmatpush.bf16.msra.mxu0 %v479
    %497 = vmatpush.bf16.msra.mxu0 %v478
    %498 = vmatpush.bf16.msra.mxu0 %v477
    %499 = vmatpush.bf16.msra.mxu0 %v476
    %500 = vmatmul.bf16.gmra.mxu0 %v423
    %v501 = vpop.f32.mrf.mxu0
    %v502 = vadd.f32 %v442, %v501
    %v503 = vpop.f32.mrf.mxu0
    %504 = vdwg.mxu0
    %v505 = vld [vmem:[%s1] sm:$0xff]
    %v506 = vld [vmem:[%s2] sm:$0xff]
    %v507 = vld [vmem:[%s2 + $0x8] sm:$0xff]
    %vm508 = vcmask 64512
    %v510 = vsel %vm508, %v505, 0
    %512 = vmatpush.msra.mxu0 0.0
    %513 = vmatpush.msra.mxu0 0.0
    %514 = vmatpush.msra.mxu0 0.0
    %515 = vmatpush.msra.mxu0 0.0
    %516 = vmatpush.msra.mxu0 0.0
    %517 = vmatpush.msra.mxu0 0.0
    %518 = vmatpush.msra.mxu0 0.0
    %519 = vmatpush.msra.mxu0 0.0
    %520 = vmatpush.msra.mxu0 0.0
    %521 = vmatpush.msra.mxu0 0.0
    %522 = vmatpush.msra.mxu0 0.0
    %523 = vmatpush.msra.mxu0 0.0
    %524 = vmatpush.msra.mxu0 0.0
    %525 = vmatpush.msra.mxu0 0.0
    %526 = vmatpush.msra.mxu0 0.0
    %527 = vmatpush.msra.mxu0 %v506
    %528 = vmatmul.f32.gmra.mxu0 %v510
    %v529 = vpop.f32.mrf.mxu0
    %v530 = vadd.f32 0.0, %v529
    %531 = vdwg.mxu0
    %532 = vmatpush.msra.mxu0 0.0
    %533 = vmatpush.msra.mxu0 0.0
    %534 = vmatpush.msra.mxu0 0.0
    %535 = vmatpush.msra.mxu0 0.0
    %536 = vmatpush.msra.mxu0 0.0
    %537 = vmatpush.msra.mxu0 0.0
    %538 = vmatpush.msra.mxu0 0.0
    %539 = vmatpush.msra.mxu0 0.0
    %540 = vmatpush.msra.mxu0 0.0
    %541 = vmatpush.msra.mxu0 0.0
    %542 = vmatpush.msra.mxu0 0.0
    %543 = vmatpush.msra.mxu0 0.0
    %544 = vmatpush.msra.mxu0 0.0
    %545 = vmatpush.msra.mxu0 0.0
    %546 = vmatpush.msra.mxu0 0.0
    %547 = vmatpush.msra.mxu0 %v507
    %548 = vmatmul.f32.gmra.mxu0 %v510
    %v549 = vpop.f32.mrf.mxu0
    %v550 = vadd.f32 0.0, %v549
    %551 = vdwg.mxu0
    %v552 = vld [vmem:[#allocation2] sm:$0x3]
    %v554 = vperm.slane %v552, 0
    %v555 = vperm.slane %v552, 1
    %vm558 = vcmp.eq.f32.partialorder %v530, %v554
    %vm559 = vcmp.eq.f32.partialorder %v550, %v555
    %v560 = vsel %vm558, -3.4e+38, 0.0
    %v561 = vsel %vm559, -3.4e+38, 0.0
    %v562 = vadd.f32 %v560, %v561
    %v563 = vadd.f32 %v406, %v502
    %v564 = vadd.f32 %v563, %v562
    %565 = vst [vmem:[%s14] sm:$0xff] %v564
    // Predicated region
    $region90: #{_lambda_.1} parent=1 // pred_check
      _
    $region91: #{_lambda_.1} parent=1 // pred_check_branch
      %567 = sbr.rel (0) target = $region93
    $region92: #{_lambda_.1} parent=1 // pred_region
      _
    $region93: #{_lambda_.1} parent=1 // pred_fallthru
      _
    // Predicated region
    $region94: #{_lambda_.1} parent=1 // pred_check
      _
    $region95: #{_lambda_.1} parent=1 // pred_check_branch
      %569 = sbr.rel (0) target = $region97
    $region96: #{_lambda_.1} parent=1 // pred_region
      _
    $region97: #{_lambda_.1} parent=1 // pred_fallthru
      _
    %570 = vsyncpa [#allocation3], 1
    %571 = vsyncpa [#allocation5], 1
    %572 = vsyncpa [#allocation8], 1
    %573 = vsyncpa [#allocation11], 1
    %574 = vsyncpa [#allocation14], 1

</llo_original>
